<compile_context>
chip_gen: v5e
topology: v5e:2x2
jax: 0.10.0
libtpu: 0.0.40
codegen_flags: <defaults>
</compile_context>

<pallas_src>
import functools

import jax
import jax.numpy as jnp
from jax.experimental import pallas as pl
from jax.experimental.pallas import tpu as pltpu

_LOG2 = 0.6931471805599453
_VMEM_LIMIT = 32 * 1024 * 1024        # explicit; fits v5e/v6e/v7x budgets
_DG_PAD = 1e30                        # padded noise value -> padded sample == 0


def _softplus(x):
    # Numerically stable softplus using only exp/log (Mosaic EUP ops).
    return jnp.maximum(x, 0.0) + jnp.log(1.0 + jnp.exp(-jnp.abs(x)))


# ---------------------------------------------------------------------------
# Prepass kernels: hard Gumbel-softmax sampling, done ONCE per element.
# ---------------------------------------------------------------------------
def _sample_zc_kernel(nu_ref, dg_ref, c_ref, out_ref):
    """out = where(softplus(nu + ln2) > dg, c, 0) as bf16  (== (Z * diag(c)) tile)."""
    keep = _softplus(nu_ref[...] + _LOG2) > dg_ref[...]
    c = jnp.broadcast_to(c_ref[...], keep.shape)            # (tm, tk) f32
    out_ref[...] = jnp.where(keep, c, 0.0).astype(jnp.bfloat16)


def _sample_at_kernel(nu_ref, dg_ref, out_ref):
    """out = where(softplus(nu + ln2) > dg, 1, 0) as bf16  (A^T tile, K-major)."""
    keep = _softplus(nu_ref[...] + _LOG2) > dg_ref[...]
    out_ref[...] = jnp.where(keep, 1.0, 0.0).astype(jnp.bfloat16)


# ---------------------------------------------------------------------------
# Main kernel: X_hat = Zc @ At (bf16 MXU operands, f32 accumulation directly
# into the VMEM-resident output block).
# ---------------------------------------------------------------------------
def _matmul_kernel(zc_ref, at_ref, out_ref):
    @pl.when(pl.program_id(2) == 0)
    def _():
        out_ref[...] = jnp.zeros_like(out_ref)

    out_ref[...] += jnp.dot(zc_ref[...], at_ref[...],
                            preferred_element_type=jnp.float32)


# ---------------------------------------------------------------------------
# Tiling helpers.
# ---------------------------------------------------------------------------
def _round_up(x, m):
    return ((x + m - 1) // m) * m


def _tile_and_pad(dim, pref, base):
    """(tile, padded_dim): full-array block when small, else a base-aligned tile
    with the dimension padded up to a multiple of it (grid always divides)."""
    if dim <= pref:
        return dim, dim
    tile = max(base, (pref // base) * base)
    return tile, _round_up(dim, tile)


def _split_for_megacore(tm, tn, n_pad, d_pad):
    """Ensure >= 2 tiles along a parallel grid axis when the problem is big
    enough, so both v7x TensorCores get work (no-op on 1-TC v5e/v6e)."""
    if n_pad // tm > 1 or d_pad // tn > 1:
        return tm, tn, n_pad, d_pad
    if d_pad >= 256:
        tn = _round_up((d_pad + 1) // 2, 128)
        return tm, tn, n_pad, _round_up(d_pad, tn)
    if n_pad >= 32:
        tm = _round_up((n_pad + 1) // 2, 16)
        return tm, tn, _round_up(n_pad, tm), d_pad
    return tm, tn, n_pad, d_pad


def _pad2(x, rows, cols, value=0.0):
    pr, pc = rows - x.shape[0], cols - x.shape[1]
    if pr == 0 and pc == 0:
        return x
    return jnp.pad(x, ((0, pr), (0, pc)), constant_values=value)


# ---------------------------------------------------------------------------
# Forward pass.
# ---------------------------------------------------------------------------
@functools.partial(jax.jit, static_argnames=("tm_pref", "tn_pref", "tk_pref"))
def linear_model_forward(nu_z, dgz, nu_a, dga, c,
                         *, tm_pref=512, tn_pref=1024, tk_pref=1024):
    """X_hat = Z @ diag(c) @ A.T with Z, A sampled in-kernel.

    nu_z: (N, K) IBP logits for Z;   dgz: (N, K) logistic noise (g1 - g0)
    nu_a: (D, K) IBP logits for A;   dga: (D, K) logistic noise (g1 - g0)
    c:    (1, K) Gaussian sample mean + 0.5*exp(log_var)*eps
    """
    N, K = nu_z.shape
    D, _ = nu_a.shape

    # Tile sizes (full-array blocks when small) + padded extents.
    tm, n_pad = _tile_and_pad(N, tm_pref, 16)    # sublane of bf16 Zc / f32 out
    tn, d_pad = _tile_and_pad(D, tn_pref, 128)   # lane-dense output tile
    tk, k_pad = _tile_and_pad(K, tk_pref, 128)   # contraction tile
    tm, tn, n_pad, d_pad = _split_for_megacore(tm, tn, n_pad, d_pad)

    # Zero-pad so every grid divides exactly.  Padded noise is huge so the
    # padded samples are 0 => padded K columns contribute nothing; padded
    # N/D rows/cols are sliced off at the end.
    nu_z_p = _pad2(nu_z, n_pad, k_pad)
    dgz_p = _pad2(dgz, n_pad, k_pad, _DG_PAD)
    nu_at_p = _pad2(nu_a.T, k_pad, d_pad)        # present A-side K-major
    dga_t_p = _pad2(dga.T, k_pad, d_pad, _DG_PAD)
    c_p = _pad2(c, 1, k_pad)

    mosaic_2d = pltpu.CompilerParams(
        dimension_semantics=("parallel", "parallel"),
        vmem_limit_bytes=_VMEM_LIMIT)

    # ---- Prepass 1: Zc = Z * diag(c), bf16, shape (n_pad, k_pad).
    zc = pl.pallas_call(
        _sample_zc_kernel,
        out_shape=jax.ShapeDtypeStruct((n_pad, k_pad), jnp.bfloat16),
        grid_spec=pltpu.PrefetchScalarGridSpec(
            num_scalar_prefetch=0,
            grid=(n_pad // tm, k_pad // tk),
            in_specs=[
                pl.BlockSpec((tm, tk), lambda i, k: (i, k)),   # nu_z
                pl.BlockSpec((tm, tk), lambda i, k: (i, k)),   # dgz
                pl.BlockSpec((1, tk), lambda i, k: (0, k)),    # c
            ],
            out_specs=pl.BlockSpec((tm, tk), lambda i, k: (i, k)),
        ),
        compiler_params=mosaic_2d,
    )(nu_z_p, dgz_p, c_p)

    # ---- Prepass 2: At = A^T, bf16, shape (k_pad, d_pad) (K-major RHS).
    at = pl.pallas_call(
        _sample_at_kernel,
        out_shape=jax.ShapeDtypeStruct((k_pad, d_pad), jnp.bfloat16),
        grid_spec=pltpu.PrefetchScalarGridSpec(
            num_scalar_prefetch=0,
            grid=(k_pad // tk, d_pad // tn),
            in_specs=[
                pl.BlockSpec((tk, tn), lambda k, j: (k, j)),   # nu_a^T
                pl.BlockSpec((tk, tn), lambda k, j: (k, j)),   # dga^T
            ],
            out_specs=pl.BlockSpec((tk, tn), lambda k, j: (k, j)),
        ),
        compiler_params=mosaic_2d,
    )(nu_at_p, dga_t_p)

    # ---- Main: X_hat = Zc @ At (standard bf16 matmul, f32 accumulation).
    out_p = pl.pallas_call(
        _matmul_kernel,
        out_shape=jax.ShapeDtypeStruct((n_pad, d_pad), jnp.float32),
        grid_spec=pltpu.PrefetchScalarGridSpec(
            num_scalar_prefetch=0,
            grid=(n_pad // tm, d_pad // tn, k_pad // tk),
            in_specs=[
                pl.BlockSpec((tm, tk), lambda i, j, k: (i, k)),   # Zc
                pl.BlockSpec((tk, tn), lambda i, j, k: (k, j)),   # At
            ],
            out_specs=pl.BlockSpec((tm, tn), lambda i, j, k: (i, j)),
        ),
        compiler_params=pltpu.CompilerParams(
            dimension_semantics=("parallel", "parallel", "arbitrary"),
            vmem_limit_bytes=_VMEM_LIMIT),
    )(zc, at)

    if (n_pad, d_pad) != (N, D):
        out_p = out_p[:N, :D]
    return out_p


def reference_forward(nu_z, dgz, nu_a, dga, c):
    """Pure-JAX reference with identical math (bf16 rounding lands on Z*c only).

    The sampling rule softplus(nu + ln2) > dg is algebraically identical to the
    module's  log(p) + g0 > log(1-p) + g1  with p = 0.5*(1 + sigmoid(nu)) and
    dg = g1 - g0 (hard Gumbel-softmax over two categories, take index 0).
    """
    zc = jnp.where(_softplus(nu_z + _LOG2) > dgz, c, 0.0).astype(jnp.bfloat16)
    a = jnp.where(_softplus(nu_a + _LOG2) > dga, 1.0, 0.0).astype(jnp.bfloat16)
    return jnp.dot(zc, a.T, preferred_element_type=jnp.float32)


if __name__ == "__main__":
    # Small shapes consistent with LinearModel(N, D, K).
    N, D, K = 8, 16, 8

    key = jax.random.PRNGKey(0)
    k_nu_z, k_nu_a, k_mean, k_dgz, k_dga, k_eps = jax.random.split(key, 6)

    # Parameters (synthetic init mirroring module shapes):
    nu_z = jax.random.normal(k_nu_z, (N, K), dtype=jnp.float32)     # Z_module.nu
    nu_a = jax.random.normal(k_nu_a, (D, K), dtype=jnp.float32)     # A_module.nu
    mean_c = jax.random.normal(k_mean, (1, K), dtype=jnp.float32)   # c_module.mean (row)
    log_var_c = jnp.zeros((1, K), dtype=jnp.float32)                # c_module.log_var init

    # Sampling noise.  g1 - g0 for two independent Gumbel(0,1) draws is
    # Logistic(0,1); ship only the difference (half the noise bytes).
    dgz = jax.random.logistic(k_dgz, (N, K), dtype=jnp.float32)
    dga = jax.random.logistic(k_dga, (D, K), dtype=jnp.float32)
    eps_c = jax.random.normal(k_eps, (1, K), dtype=jnp.float32)

    # IndependentGaussian rsample: c = mean + (0.5 * exp(log_var)) * eps
    c = mean_c + (0.5 * jnp.exp(log_var_c)) * eps_c                 # (1, K)

    out = jax.block_until_ready(linear_model_forward(nu_z, dgz, nu_a, dga, c))

    ref = reference_forward(nu_z, dgz, nu_a, dga, c)
    assert out.shape == (N, D)
    assert jnp.allclose(out, ref, atol=1e-4, rtol=1e-4), "mismatch vs reference"

    print("KERNEL_OK")
</pallas_src>

<mosaic_0001>
module attributes {stable_mosaic.version = 11 : i64} {
  func.func @_matmul_kernel(%arg0: i32, %arg1: i32, %arg2: i32, %arg3: memref<8x8xbf16, #tpu.memory_space<vmem>>, %arg4: memref<8x16xbf16, #tpu.memory_space<vmem>>, %arg5: memref<8x16xf32, #tpu.memory_space<vmem>>) attributes {dimension_semantics = [#tpu.dimension_semantics<parallel>, #tpu.dimension_semantics<parallel>, #tpu.dimension_semantics<arbitrary>], iteration_bounds = array<i64: 1, 1, 1>, scalar_prefetch = 0 : i64, scratch_operands = 0 : i64, tpu.core_type = #tpu.core_type<tc>, window_params = [{transform_indices = @transform_0, window_bounds = array<i64: 8, 8>}, {transform_indices = @transform_1, window_bounds = array<i64: 8, 16>}, {transform_indices = @transform_2, window_bounds = array<i64: 8, 16>}]} {
    %c0_i32 = arith.constant 0 : i32
    %0 = arith.cmpi eq, %arg2, %c0_i32 : i32
    %1 = arith.extui %0 : i1 to i32
    %c0_i32_0 = arith.constant 0 : i32
    %2 = arith.cmpi ne, %1, %c0_i32_0 : i32
    scf.if %2 {
      %cst_8 = arith.constant 0.000000e+00 : f32
      %9 = vector.broadcast %cst_8 : f32 to vector<8x16xf32>
      %c0_9 = arith.constant 0 : index
      %c0_10 = arith.constant 0 : index
      %10 = vector.load %arg5[%c0_9, %c0_10] : memref<8x16xf32, #tpu.memory_space<vmem>>, vector<8x16xf32>
      tpu.vector_store %arg5[%c0_9, %c0_10], %9 {strides = array<i32>} : memref<8x16xf32, #tpu.memory_space<vmem>>, vector<8x16xf32>,
    } else {
    }
    %c0 = arith.constant 0 : index
    %c0_1 = arith.constant 0 : index
    %3 = vector.load %arg5[%c0, %c0_1] : memref<8x16xf32, #tpu.memory_space<vmem>>, vector<8x16xf32>
    %c0_2 = arith.constant 0 : index
    %c0_3 = arith.constant 0 : index
    %4 = vector.load %arg3[%c0_2, %c0_3] : memref<8x8xbf16, #tpu.memory_space<vmem>>, vector<8x8xbf16>
    %c0_4 = arith.constant 0 : index
    %c0_5 = arith.constant 0 : index
    %5 = vector.load %arg4[%c0_4, %c0_5] : memref<8x16xbf16, #tpu.memory_space<vmem>>, vector<8x16xbf16>
    %cst = arith.constant dense<0.000000e+00> : vector<8x16xf32>
    %6 = tpu.matmul %4, %5, %cst {dimension_numbers = #tpu.dot_dimension_numbers<[1], [0], [0], [1], [0, 0, 1, 1], [], []>} : vector<8x8xbf16>, vector<8x16xbf16>, vector<8x16xf32> -> vector<8x16xf32>
    %7 = arith.addf %3, %6 : vector<8x16xf32>
    %c0_6 = arith.constant 0 : index
    %c0_7 = arith.constant 0 : index
    %8 = vector.load %arg5[%c0_6, %c0_7] : memref<8x16xf32, #tpu.memory_space<vmem>>, vector<8x16xf32>
    tpu.vector_store %arg5[%c0_6, %c0_7], %7 {strides = array<i32>} : memref<8x16xf32, #tpu.memory_space<vmem>>, vector<8x16xf32>,
    return
  }
  func.func @transform_0(%arg0: i32, %arg1: i32, %arg2: i32) -> (i32, i32) {
    %c0_i32 = arith.constant 0 : i32
    return %arg0, %arg2 : i32, i32
  }
  func.func @transform_1(%arg0: i32, %arg1: i32, %arg2: i32) -> (i32, i32) {
    %c0_i32 = arith.constant 0 : i32
    return %arg2, %arg1 : i32, i32
  }
  func.func @transform_2(%arg0: i32, %arg1: i32, %arg2: i32) -> (i32, i32) {
    %c0_i32 = arith.constant 0 : i32
    return %arg0, %arg1 : i32, i32
  }
}

module attributes {stable_mosaic.version = 11 : i64} {
  func.func @_sample_at_kernel(%arg0: i32, %arg1: i32, %arg2: memref<8x16xf32, #tpu.memory_space<vmem>>, %arg3: memref<8x16xf32, #tpu.memory_space<vmem>>, %arg4: memref<8x16xbf16, #tpu.memory_space<vmem>>) attributes {dimension_semantics = [#tpu.dimension_semantics<parallel>, #tpu.dimension_semantics<parallel>], iteration_bounds = array<i64: 1, 1>, scalar_prefetch = 0 : i64, scratch_operands = 0 : i64, tpu.core_type = #tpu.core_type<tc>, window_params = [{transform_indices = @transform_0, window_bounds = array<i64: 8, 16>}, {transform_indices = @transform_1, window_bounds = array<i64: 8, 16>}, {transform_indices = @transform_2, window_bounds = array<i64: 8, 16>}]} {
    %c0 = arith.constant 0 : index
    %c0_0 = arith.constant 0 : index
    %0 = vector.load %arg2[%c0, %c0_0] : memref<8x16xf32, #tpu.memory_space<vmem>>, vector<8x16xf32>
    %cst = arith.constant 0.693147182 : f32
    %1 = vector.broadcast %cst : f32 to vector<8x16xf32>
    %2 = arith.addf %0, %1 : vector<8x16xf32>
    %cst_1 = arith.constant 0.000000e+00 : f32
    %3 = vector.broadcast %cst_1 : f32 to vector<8x16xf32>
    %4 = arith.maximumf %2, %3 : vector<8x16xf32>
    %5 = math.absf %2 : vector<8x16xf32>
    %cst_2 = arith.constant 0.000000e+00 : f32
    %6 = vector.broadcast %cst_2 : f32 to vector<8x16xf32>
    %7 = arith.subf %6, %5 : vector<8x16xf32>
    %8 = math.exp %7 : vector<8x16xf32>
    %cst_3 = arith.constant 1.000000e+00 : f32
    %9 = vector.broadcast %cst_3 : f32 to vector<8x16xf32>
    %10 = arith.addf %9, %8 : vector<8x16xf32>
    %11 = math.log %10 : vector<8x16xf32>
    %12 = arith.addf %4, %11 : vector<8x16xf32>
    %c0_4 = arith.constant 0 : index
    %c0_5 = arith.constant 0 : index
    %13 = vector.load %arg3[%c0_4, %c0_5] : memref<8x16xf32, #tpu.memory_space<vmem>>, vector<8x16xf32>
    %14 = arith.cmpf ogt, %12, %13 : vector<8x16xf32>
    %cst_6 = arith.constant 1.000000e+00 : f32
    %cst_7 = arith.constant 0.000000e+00 : f32
    %15 = vector.broadcast %cst_6 : f32 to vector<8x16xf32>
    %16 = vector.broadcast %cst_7 : f32 to vector<8x16xf32>
    %17 = arith.select %14, %15, %16 : vector<8x16xi1>, vector<8x16xf32>
    %18 = arith.truncf %17 : vector<8x16xf32> to vector<8x16xbf16>
    %c0_8 = arith.constant 0 : index
    %c0_9 = arith.constant 0 : index
    %19 = vector.load %arg4[%c0_8, %c0_9] : memref<8x16xbf16, #tpu.memory_space<vmem>>, vector<8x16xbf16>
    tpu.vector_store %arg4[%c0_8, %c0_9], %18 {strides = array<i32>} : memref<8x16xbf16, #tpu.memory_space<vmem>>, vector<8x16xbf16>,
    return
  }
  func.func @transform_0(%arg0: i32, %arg1: i32) -> (i32, i32) {
    %c0_i32 = arith.constant 0 : i32
    return %arg0, %arg1 : i32, i32
  }
  func.func @transform_1(%arg0: i32, %arg1: i32) -> (i32, i32) {
    %c0_i32 = arith.constant 0 : i32
    return %arg0, %arg1 : i32, i32
  }
  func.func @transform_2(%arg0: i32, %arg1: i32) -> (i32, i32) {
    %c0_i32 = arith.constant 0 : i32
    return %arg0, %arg1 : i32, i32
  }
}

module attributes {stable_mosaic.version = 11 : i64} {
  func.func @_sample_zc_kernel(%arg0: i32, %arg1: i32, %arg2: memref<8x8xf32, #tpu.memory_space<vmem>>, %arg3: memref<8x8xf32, #tpu.memory_space<vmem>>, %arg4: memref<1x8xf32, #tpu.memory_space<vmem>>, %arg5: memref<8x8xbf16, #tpu.memory_space<vmem>>) attributes {dimension_semantics = [#tpu.dimension_semantics<parallel>, #tpu.dimension_semantics<parallel>], iteration_bounds = array<i64: 1, 1>, scalar_prefetch = 0 : i64, scratch_operands = 0 : i64, tpu.core_type = #tpu.core_type<tc>, window_params = [{transform_indices = @transform_0, window_bounds = array<i64: 8, 8>}, {transform_indices = @transform_1, window_bounds = array<i64: 8, 8>}, {transform_indices = @transform_2, window_bounds = array<i64: 1, 8>}, {transform_indices = @transform_3, window_bounds = array<i64: 8, 8>}]} {
    %c0 = arith.constant 0 : index
    %c0_0 = arith.constant 0 : index
    %0 = vector.load %arg2[%c0, %c0_0] : memref<8x8xf32, #tpu.memory_space<vmem>>, vector<8x8xf32>
    %cst = arith.constant 0.693147182 : f32
    %1 = vector.broadcast %cst : f32 to vector<8x8xf32>
    %2 = arith.addf %0, %1 : vector<8x8xf32>
    %cst_1 = arith.constant 0.000000e+00 : f32
    %3 = vector.broadcast %cst_1 : f32 to vector<8x8xf32>
    %4 = arith.maximumf %2, %3 : vector<8x8xf32>
    %5 = math.absf %2 : vector<8x8xf32>
    %cst_2 = arith.constant 0.000000e+00 : f32
    %6 = vector.broadcast %cst_2 : f32 to vector<8x8xf32>
    %7 = arith.subf %6, %5 : vector<8x8xf32>
    %8 = math.exp %7 : vector<8x8xf32>
    %cst_3 = arith.constant 1.000000e+00 : f32
    %9 = vector.broadcast %cst_3 : f32 to vector<8x8xf32>
    %10 = arith.addf %9, %8 : vector<8x8xf32>
    %11 = math.log %10 : vector<8x8xf32>
    %12 = arith.addf %4, %11 : vector<8x8xf32>
    %c0_4 = arith.constant 0 : index
    %c0_5 = arith.constant 0 : index
    %13 = vector.load %arg3[%c0_4, %c0_5] : memref<8x8xf32, #tpu.memory_space<vmem>>, vector<8x8xf32>
    %14 = arith.cmpf ogt, %12, %13 : vector<8x8xf32>
    %c0_6 = arith.constant 0 : index
    %c0_7 = arith.constant 0 : index
    %15 = vector.load %arg4[%c0_6, %c0_7] : memref<1x8xf32, #tpu.memory_space<vmem>>, vector<1x8xf32>
    %16 = vector.shape_cast %15 : vector<1x8xf32> to vector<1x8xf32>
    %17 = vector.broadcast %16 : vector<1x8xf32> to vector<8x8xf32>
    %cst_8 = arith.constant 0.000000e+00 : f32
    %18 = vector.broadcast %cst_8 : f32 to vector<8x8xf32>
    %19 = arith.select %14, %17, %18 : vector<8x8xi1>, vector<8x8xf32>
    %20 = arith.truncf %19 : vector<8x8xf32> to vector<8x8xbf16>
    %c0_9 = arith.constant 0 : index
    %c0_10 = arith.constant 0 : index
    %21 = vector.load %arg5[%c0_9, %c0_10] : memref<8x8xbf16, #tpu.memory_space<vmem>>, vector<8x8xbf16>
    tpu.vector_store %arg5[%c0_9, %c0_10], %20 {strides = array<i32>} : memref<8x8xbf16, #tpu.memory_space<vmem>>, vector<8x8xbf16>,
    return
  }
  func.func @transform_0(%arg0: i32, %arg1: i32) -> (i32, i32) {
    %c0_i32 = arith.constant 0 : i32
    return %arg0, %arg1 : i32, i32
  }
  func.func @transform_1(%arg0: i32, %arg1: i32) -> (i32, i32) {
    %c0_i32 = arith.constant 0 : i32
    return %arg0, %arg1 : i32, i32
  }
  func.func @transform_2(%arg0: i32, %arg1: i32) -> (i32, i32) {
    %c0_i32 = arith.constant 0 : i32
    %c0_i32_0 = arith.constant 0 : i32
    return %c0_i32, %arg1 : i32, i32
  }
  func.func @transform_3(%arg0: i32, %arg1: i32) -> (i32, i32) {
    %c0_i32 = arith.constant 0 : i32
    return %arg0, %arg1 : i32, i32
  }
}

</mosaic_0001>

<llo_original>
// kernel: linear_model_forward.5
$region0: #{linear_model_forward.5}
  #allocation0 [shape = 'u32[]', space=smem, size = 0x4, offset = 0x4, fixed_abs, tag = 'smem constant byte address 0x4 - core index']
  #allocation1 [shape = 'u32[72,128]{1,0:T(1,128)}', space=vmem, size = 0x9000, scoped, tag = 'internal scratch']
  %s0 = inlined_call_operand.vmem [shape: bf16[8,8], index: 0, kind: input, shape index: {}]
  %s1 = inlined_call_operand.vmem [shape: bf16[8,16], index: 1, kind: input, shape index: {}]
  %s2 = inlined_call_operand.hbm [shape: f32[8,16], index: 2, kind: output, shape index: {}]
  %s3 = sld [smem:[#allocation0]]
  $region22: #{linear_model_forward.5} parent=0
    _
  %s5 = ssub.s32 1, %s3
  %s6 = scalar_select 0, %s5, %s3
  $region1: #{linear_model_forward.5} parent=0
    #allocation2 [shape = 'u8[4096]{0}', space=vmem, size = 0x1000, scoped, tag = 'output window, operand 0, single buffered']
    #allocation3 [shape = 's32[1]{0}', space=sflag, size = 0x4, scoped, tag = 'scoped memory for linear_model_forward.5']
    %7 = vsyncpa [#allocation3], 0
    // Predicated region
    $region2: #{linear_model_forward.5} parent=1 // pred_check
      _
    $region3: #{linear_model_forward.5} parent=1 // pred_check_branch
      %9 = sbr.rel (0) target = $region5
    $region4: #{linear_model_forward.5} parent=1 // pred_region
      _
    $region5: #{linear_model_forward.5} parent=1 // pred_fallthru
      _
    // Predicated region
    $region6: #{linear_model_forward.5} parent=1 // pred_check
      _
    $region7: #{linear_model_forward.5} parent=1 // pred_check_branch
      %11 = sbr.rel (0) target = $region9
    $region8: #{linear_model_forward.5} parent=1 // pred_region
      _
    $region9: #{linear_model_forward.5} parent=1 // pred_fallthru
      _
    %p13 = scmp.eq.s32.totalorder 0, 0
    // Predicated region
    $region10: #{linear_model_forward.5} parent=1 // pred_check
      %p14 = pneg %p13
    $region11: #{linear_model_forward.5} parent=1 // pred_check_branch
      %16 = sbr.rel (%p14) target = $region13
    $region12: #{linear_model_forward.5} parent=1 // pred_region
      %vm17 = vcmask 130048
      %18 = vst.msk [vmem:[#allocation2] sm:$0xff] %vm17, 0.0
    $region13: #{linear_model_forward.5} parent=1 // pred_fallthru
      _
    %v19 = vld [vmem:[#allocation2] sm:$0xff]
    %v20 = vld [vmem:[%s0] sm:$0xf]
    %v21 = vld [vmem:[%s1] sm:$0xf]
    %vm22 = vcmask 64512
    %v24 = vsel %vm22, %v20, 0
    %vm26 = vcmask 1043456
    %v28 = vsel %vm26, %v21, 0
    %30 = vmatpush.bf16.msra.mxu0 0
    %31 = vmatpush.bf16.msra.mxu0 0
    %32 = vmatpush.bf16.msra.mxu0 0
    %33 = vmatpush.bf16.msra.mxu0 0
    %34 = vmatpush.bf16.msra.mxu0 0
    %35 = vmatpush.bf16.msra.mxu0 0
    %36 = vmatpush.bf16.msra.mxu0 0
    %37 = vmatpush.bf16.msra.mxu0 %v28
    %38 = vmatmul.bf16.gmra.mxu0 %v24
    %v39 = vpop.f32.mrf.mxu0
    %v40 = vadd.f32 0.0, %v39
    %v41 = vpop.f32.mrf.mxu0
    %42 = vdwg.mxu0
    %v43 = vadd.f32 %v19, %v40
    %vm44 = vcmask 130048
    %45 = vst.msk [vmem:[#allocation2] sm:$0xff] %vm44, %v43
    // Predicated region
    $region14: #{linear_model_forward.5} parent=1 // pred_check
      _
    $region15: #{linear_model_forward.5} parent=1 // pred_check_branch
      %47 = sbr.rel (0) target = $region17
    $region16: #{linear_model_forward.5} parent=1 // pred_region
      %49 = vsyncadd [#allocation3], 0
      %s51 = sshll.u32 [#allocation2], 4
      %s52 = int_to_ptr.vmem [resolvable:$true] %s51
      %s53 = sshll.u32 %s2, 4
      %s54 = int_to_ptr.hbm [resolvable:$true] %s53
      %56 = dma.vmem_to_hbm [thread:$0]  %s52, 128, %s54, [#allocation3]
    $region17: #{linear_model_forward.5} parent=1 // pred_fallthru
      _
    // Predicated region
    $region18: #{linear_model_forward.5} parent=1 // pred_check
      _
    $region19: #{linear_model_forward.5} parent=1 // pred_check_branch
      %58 = sbr.rel (0) target = $region21
    $region20: #{linear_model_forward.5} parent=1 // pred_region
      %60 = dma.done [#allocation3], 128
    $region21: #{linear_model_forward.5} parent=1 // pred_fallthru
      _
    %61 = vsyncpa [#allocation3], 1

// kernel: linear_model_forward.4
$region0: #{linear_model_forward.4}
  #allocation0 [shape = 'u32[]', space=smem, size = 0x4, offset = 0x4, fixed_abs, tag = 'smem constant byte address 0x4 - core index']
  #allocation1 [shape = 'u32[72,128]{1,0:T(1,128)}', space=vmem, size = 0x9000, scoped, tag = 'internal scratch']
  %s0 = inlined_call_operand.hbm [shape: f32[8,16], index: 0, kind: input, shape index: {}]
  %s1 = inlined_call_operand.hbm [shape: f32[8,16], index: 1, kind: input, shape index: {}]
  %s2 = inlined_call_operand.vmem [shape: bf16[8,16], index: 2, kind: output, shape index: {}]
  %s3 = sld [smem:[#allocation0]]
  $region26: #{linear_model_forward.4} parent=0
    _
  %s5 = ssub.s32 1, %s3
  %s6 = scalar_select 0, %s5, %s3
  $region1: #{linear_model_forward.4} parent=0
    #allocation2 [shape = 'u8[4096]{0}', space=vmem, size = 0x1000, scoped, tag = 'input window, operand 0, single buffered']
    #allocation3 [shape = 's32[1]{0}', space=sflag, size = 0x4, scoped, tag = 'scoped memory for linear_model_forward.4']
    #allocation4 [shape = 'u8[4096]{0}', space=vmem, size = 0x1000, scoped, tag = 'input window, operand 1, single buffered']
    #allocation5 [shape = 's32[1]{0}', space=sflag, size = 0x4, scoped, tag = 'scoped memory for linear_model_forward.4']
    %7 = vsyncpa [#allocation3], 0
    %8 = vsyncpa [#allocation5], 0
    // Predicated region
    $region2: #{linear_model_forward.4} parent=1 // pred_check
      _
    $region3: #{linear_model_forward.4} parent=1 // pred_check_branch
      %10 = sbr.rel (0) target = $region5
    $region4: #{linear_model_forward.4} parent=1 // pred_region
      %12 = vsyncadd [#allocation3], 0
      %s14 = sshll.u32 %s0, 4
      %s15 = int_to_ptr.hbm [resolvable:$true] %s14
      %s16 = sshll.u32 [#allocation2], 4
      %s17 = int_to_ptr.vmem [resolvable:$true] %s16
      %19 = dma.hbm_to_vmem [thread:$0]  %s15, 128, %s17, [#allocation3]
    $region5: #{linear_model_forward.4} parent=1 // pred_fallthru
      _
    // Predicated region
    $region6: #{linear_model_forward.4} parent=1 // pred_check
      _
    $region7: #{linear_model_forward.4} parent=1 // pred_check_branch
      %21 = sbr.rel (0) target = $region9
    $region8: #{linear_model_forward.4} parent=1 // pred_region
      %23 = vsyncadd [#allocation5], 0
      %s25 = sshll.u32 %s1, 4
      %s26 = int_to_ptr.hbm [resolvable:$true] %s25
      %s27 = sshll.u32 [#allocation4], 4
      %s28 = int_to_ptr.vmem [resolvable:$true] %s27
      %30 = dma.hbm_to_vmem [thread:$0]  %s26, 128, %s28, [#allocation5]
    $region9: #{linear_model_forward.4} parent=1 // pred_fallthru
      _
    // Predicated region
    $region10: #{linear_model_forward.4} parent=1 // pred_check
      _
    $region11: #{linear_model_forward.4} parent=1 // pred_check_branch
      %32 = sbr.rel (0) target = $region13
    $region12: #{linear_model_forward.4} parent=1 // pred_region
      %34 = dma.done [#allocation3], 128
    $region13: #{linear_model_forward.4} parent=1 // pred_fallthru
      _
    // Predicated region
    $region14: #{linear_model_forward.4} parent=1 // pred_check
      _
    $region15: #{linear_model_forward.4} parent=1 // pred_check_branch
      %36 = sbr.rel (0) target = $region17
    $region16: #{linear_model_forward.4} parent=1 // pred_region
      %38 = dma.done [#allocation5], 128
    $region17: #{linear_model_forward.4} parent=1 // pred_fallthru
      _
    %v39 = vld [vmem:[#allocation2] sm:$0xff]
    %v40 = vadd.f32 %v39, 0.6931472
    %v41 = vmax.f32 %v40, 0.0
    %v42 = vand.u32 2147483647, %v40
    %v43 = vsub.f32 0.0, %v42
    %v44 = vmul.f32 %v43, 1.442695
    %v45 = vpow.pop %v44
    %v46 = vadd.f32 %v45, 1.0
    %v47 = vlog2.pop %v46
    %v48 = vmul.f32 %v47, 0.6931472
    %v49 = vadd.f32 %v41, %v48
    %v50 = vld [vmem:[#allocation4] sm:$0xff]
    %vm51 = vcmp.gt.f32.partialorder %v49, %v50
    %v52 = vsel %vm51, 1.0, 0.0
    %v53 = vpack.c.bf16 %v52, %v52
    %vm54 = vcmask 125952
    %55 = vst.msk [vmem:[%s2] sm:$0xf] %vm54, %v53
    // Predicated region
    $region18: #{linear_model_forward.4} parent=1 // pred_check
      _
    $region19: #{linear_model_forward.4} parent=1 // pred_check_branch
      %57 = sbr.rel (0) target = $region21
    $region20: #{linear_model_forward.4} parent=1 // pred_region
      _
    $region21: #{linear_model_forward.4} parent=1 // pred_fallthru
      _
    // Predicated region
    $region22: #{linear_model_forward.4} parent=1 // pred_check
      _
    $region23: #{linear_model_forward.4} parent=1 // pred_check_branch
      %59 = sbr.rel (0) target = $region25
    $region24: #{linear_model_forward.4} parent=1 // pred_region
      _
    $region25: #{linear_model_forward.4} parent=1 // pred_fallthru
      _
    %60 = vsyncpa [#allocation3], 1
    %61 = vsyncpa [#allocation5], 1

// kernel: linear_model_forward.3
$region0: #{linear_model_forward.3}
  #allocation0 [shape = 'u32[]', space=smem, size = 0x4, offset = 0x4, fixed_abs, tag = 'smem constant byte address 0x4 - core index']
  #allocation1 [shape = 'u32[72,128]{1,0:T(1,128)}', space=vmem, size = 0x9000, scoped, tag = 'internal scratch']
  %s0 = inlined_call_operand.hbm [shape: f32[8,8], index: 0, kind: input, shape index: {}]
  %s1 = inlined_call_operand.hbm [shape: f32[8,8], index: 1, kind: input, shape index: {}]
  %s2 = inlined_call_operand.vmem [shape: f32[1,8], index: 2, kind: input, shape index: {}]
  %s3 = inlined_call_operand.vmem [shape: bf16[8,8], index: 3, kind: output, shape index: {}]
  %s4 = sld [smem:[#allocation0]]
  $region30: #{linear_model_forward.3} parent=0
    _
  %s6 = ssub.s32 1, %s4
  %s7 = scalar_select 0, %s6, %s4
  $region1: #{linear_model_forward.3} parent=0
    #allocation2 [shape = 'u8[4096]{0}', space=vmem, size = 0x1000, scoped, tag = 'input window, operand 0, single buffered']
    #allocation3 [shape = 's32[1]{0}', space=sflag, size = 0x4, scoped, tag = 'scoped memory for linear_model_forward.3']
    #allocation4 [shape = 'u8[4096]{0}', space=vmem, size = 0x1000, scoped, tag = 'input window, operand 1, single buffered']
    #allocation5 [shape = 's32[1]{0}', space=sflag, size = 0x4, scoped, tag = 'scoped memory for linear_model_forward.3']
    %8 = vsyncpa [#allocation3], 0
    %9 = vsyncpa [#allocation5], 0
    // Predicated region
    $region2: #{linear_model_forward.3} parent=1 // pred_check
      _
    $region3: #{linear_model_forward.3} parent=1 // pred_check_branch
      %11 = sbr.rel (0) target = $region5
    $region4: #{linear_model_forward.3} parent=1 // pred_region
      %13 = vsyncadd [#allocation3], 0
      %s15 = sshll.u32 %s0, 4
      %s16 = int_to_ptr.hbm [resolvable:$true] %s15
      %s17 = sshll.u32 [#allocation2], 4
      %s18 = int_to_ptr.vmem [resolvable:$true] %s17
      %20 = dma.hbm_to_vmem [thread:$0]  %s16, 128, %s18, [#allocation3]
    $region5: #{linear_model_forward.3} parent=1 // pred_fallthru
      _
    // Predicated region
    $region6: #{linear_model_forward.3} parent=1 // pred_check
      _
    $region7: #{linear_model_forward.3} parent=1 // pred_check_branch
      %22 = sbr.rel (0) target = $region9
    $region8: #{linear_model_forward.3} parent=1 // pred_region
      %24 = vsyncadd [#allocation5], 0
      %s26 = sshll.u32 %s1, 4
      %s27 = int_to_ptr.hbm [resolvable:$true] %s26
      %s28 = sshll.u32 [#allocation4], 4
      %s29 = int_to_ptr.vmem [resolvable:$true] %s28
      %31 = dma.hbm_to_vmem [thread:$0]  %s27, 128, %s29, [#allocation5]
    $region9: #{linear_model_forward.3} parent=1 // pred_fallthru
      _
    // Predicated region
    $region10: #{linear_model_forward.3} parent=1 // pred_check
      _
    $region11: #{linear_model_forward.3} parent=1 // pred_check_branch
      %33 = sbr.rel (0) target = $region13
    $region12: #{linear_model_forward.3} parent=1 // pred_region
      _
    $region13: #{linear_model_forward.3} parent=1 // pred_fallthru
      _
    // Predicated region
    $region14: #{linear_model_forward.3} parent=1 // pred_check
      _
    $region15: #{linear_model_forward.3} parent=1 // pred_check_branch
      %35 = sbr.rel (0) target = $region17
    $region16: #{linear_model_forward.3} parent=1 // pred_region
      %37 = dma.done [#allocation3], 128
    $region17: #{linear_model_forward.3} parent=1 // pred_fallthru
      _
    // Predicated region
    $region18: #{linear_model_forward.3} parent=1 // pred_check
      _
    $region19: #{linear_model_forward.3} parent=1 // pred_check_branch
      %39 = sbr.rel (0) target = $region21
    $region20: #{linear_model_forward.3} parent=1 // pred_region
      %41 = dma.done [#allocation5], 128
    $region21: #{linear_model_forward.3} parent=1 // pred_fallthru
      _
    %v42 = vld [vmem:[#allocation2] sm:$0xff]
    %v43 = vadd.f32 %v42, 0.6931472
    %v44 = vmax.f32 %v43, 0.0
    %v45 = vand.u32 2147483647, %v43
    %v46 = vsub.f32 0.0, %v45
    %v47 = vmul.f32 %v46, 1.442695
    %v48 = vpow.pop %v47
    %v49 = vadd.f32 %v48, 1.0
    %v50 = vlog2.pop %v49
    %v51 = vmul.f32 %v50, 0.6931472
    %v52 = vadd.f32 %v44, %v51
    %v53 = vld [vmem:[#allocation4] sm:$0xff]
    %vm54 = vcmp.gt.f32.partialorder %v52, %v53
    %v55 = vld [vmem:[%s2] sm:$0x1]
    %v57 = vperm.slane %v55, 0
    %v59 = vsel %vm54, %v57, 0.0
    %v60 = vpack.c.bf16 %v59, %v59
    %vm61 = vcmask 60416
    %62 = vst.msk [vmem:[%s3] sm:$0xf] %vm61, %v60
    // Predicated region
    $region22: #{linear_model_forward.3} parent=1 // pred_check
      _
    $region23: #{linear_model_forward.3} parent=1 // pred_check_branch
      %64 = sbr.rel (0) target = $region25
    $region24: #{linear_model_forward.3} parent=1 // pred_region
      _
    $region25: #{linear_model_forward.3} parent=1 // pred_fallthru
      _
    // Predicated region
    $region26: #{linear_model_forward.3} parent=1 // pred_check
      _
    $region27: #{linear_model_forward.3} parent=1 // pred_check_branch
      %66 = sbr.rel (0) target = $region29
    $region28: #{linear_model_forward.3} parent=1 // pred_region
      _
    $region29: #{linear_model_forward.3} parent=1 // pred_fallthru
      _
    %67 = vsyncpa [#allocation3], 1
    %68 = vsyncpa [#allocation5], 1

</llo_original>
